<compile_context>
chip_gen: v5e
topology: v5e:2x2
jax: 0.10.0
libtpu: 0.0.40
codegen_flags: <defaults>
</compile_context>

<pallas_src>
import jax
import jax.numpy as jnp
from jax.experimental import pallas as pl
from jax.experimental.pallas import tpu as pltpu

LANE = 128        # TPU lane width
MXU_ROWS = 256    # v6e/v7x MXU height (also 2x v5e's 128)


def _round_up(x, m):
    return (x + m - 1) // m * m


# ----------------------------------------------------------------------------
# Kernel
# ----------------------------------------------------------------------------
def actor_kernel(x_ref, w1_ref, b1_ref, w2_ref, b2_ref, w3_ref, b3_ref, o_ref):
    # x arrives as f32 straight from HBM; cast to bf16 on the VPU so both MXU
    # operands are bf16 (f32 accumulation via preferred_element_type).
    x = x_ref[...].astype(jnp.bfloat16)
    # fc1 + ReLU (bias/ReLU in f32 on the VPU)
    h1 = jnp.dot(x, w1_ref[...], preferred_element_type=jnp.float32)
    h1 = jnp.maximum(h1 + b1_ref[...], 0.0)
    # fc2 + ReLU
    h2 = jnp.dot(h1.astype(jnp.bfloat16), w2_ref[...],
                 preferred_element_type=jnp.float32)
    h2 = jnp.maximum(h2 + b2_ref[...], 0.0)
    # fc3 + sigmoid (exp on the EUP); lane-dense bf16 store of the padded tile.
    z3 = jnp.dot(h2.astype(jnp.bfloat16), w3_ref[...],
                 preferred_element_type=jnp.float32)
    o_ref[...] = jax.nn.sigmoid(z3 + b3_ref[...]).astype(o_ref.dtype)


# ----------------------------------------------------------------------------
# Host-side parameter preparation (one-time)
# ----------------------------------------------------------------------------
def _pad2(a, rows, cols):
    r, c = a.shape
    return jnp.pad(a, ((0, rows - r), (0, cols - c)))


def prepare_actor_params(params):
    """Zero-pad hidden/action dims to multiples of 128 and cast weights to
    bfloat16 (biases stay f32).  The fc1 row dim stays = nb_states so the
    kernel can read x unpadded."""
    w1, b1 = params["w1"], params["b1"]
    w2, b2 = params["w2"], params["b2"]
    w3, b3 = params["w3"], params["b3"]
    S, H1 = w1.shape
    H2 = w2.shape[1]
    A = w3.shape[1]
    H1p, H2p, Ap = (_round_up(d, LANE) for d in (H1, H2, A))
    return {
        "w1": _pad2(w1, S, H1p).astype(jnp.bfloat16),
        "b1": _pad2(b1, 1, H1p).astype(jnp.float32),
        "w2": _pad2(w2, H1p, H2p).astype(jnp.bfloat16),
        "b2": _pad2(b2, 1, H2p).astype(jnp.float32),
        "w3": _pad2(w3, H2p, Ap).astype(jnp.bfloat16),
        "b3": _pad2(b3, 1, Ap).astype(jnp.float32),
    }


# ----------------------------------------------------------------------------
# Tiling / VMEM policy (generation-aware)
# ----------------------------------------------------------------------------
def _vmem_capacity_bytes():
    try:
        return int(pltpu.get_tpu_info().vmem_capacity_bytes)
    except Exception:
        return 64 << 20  # v7x has the smallest per-core VMEM; be conservative


def _working_set_bytes(tile_b, S, H1p, H2p, Ap):
    # Constant-index weight/bias blocks (bf16 / f32).  Still double-buffered
    # by the pipeline even though they are only DMA'd once (see TODO above).
    w = 2 * (2 * (S * H1p + H1p * H2p + H2p * Ap) + 4 * (H1p + H2p + Ap))
    # Double-buffered f32 x tile and bf16 output tile.
    io = 2 * tile_b * (4 * S + 2 * Ap)
    # Live intermediates: bf16 x recast + f32 h1/h2/z3 + their bf16 recasts.
    act = tile_b * (2 * S + 6 * H1p + 6 * H2p + 6 * Ap)
    return w + io + act


def _pick_tile_b(B, S, H1p, H2p, Ap, budget):
    B8 = _round_up(max(B, 1), 8)
    # Target an even number of >= 2 grid steps (v7x: 2 TCs, balanced tails),
    # capped at 1024 rows per step (>= ~85% of HBM roofline per tile sweeps).
    steps = max(2, pl.cdiv(B8, 1024))
    steps += steps % 2
    tile = _round_up(pl.cdiv(B8, steps), 8)
    # MXU-feed alignment when the batch is large enough: multiples of 256 keep
    # the full v6e/v7x MXU (and 2 passes of v5e's 128) fed each pass.
    if tile > MXU_ROWS:
        tile = _round_up(tile, MXU_ROWS)
    # Shrink until the working set fits the per-generation VMEM budget.
    while tile > 8 and _working_set_bytes(tile, S, H1p, H2p, Ap) > budget:
        tile = max(8, _round_up(tile // 2, 8))
    return tile


def _vmem_limit_bytes(need, cap):
    # 2x the estimated working set, floored at 16 MiB, but never above 3/4 of
    # physical VMEM (v7x: <=48 MiB of 64; v5e/v6e: <=96 MiB of 128).
    return int(min(max(2 * need, 16 << 20), (3 * cap) // 4))


# ----------------------------------------------------------------------------
# Forward wrapper
# ----------------------------------------------------------------------------
def actor_forward(x, prepared, nb_actions, *, tile_b=None):
    """Actor forward pass.

    x:         [B, nb_states] float32
    prepared:  output of prepare_actor_params
    returns:   [B, nb_actions] float32
    """
    w1, b1 = prepared["w1"], prepared["b1"]
    w2, b2 = prepared["w2"], prepared["b2"]
    w3, b3 = prepared["w3"], prepared["b3"]

    B, S = x.shape
    assert w1.shape[0] == S, "x feature dim must match fc1 weight rows"
    H1p = w1.shape[1]
    H2p = w2.shape[1]
    Ap = w3.shape[1]

    cap = _vmem_capacity_bytes()
    budget = (3 * cap) // 8  # half the vmem_limit ceiling -> always consistent
    if tile_b is None:
        tile_b = _pick_tile_b(B, S, H1p, H2p, Ap, budget)
    tile_b = max(8, _round_up(min(tile_b, _round_up(B, 8)), 8))

    grid = (pl.cdiv(B, tile_b),)  # ragged last block handled by Pallas

    in_specs = [
        # x: one f32 tile per grid step -> pipelined / double-buffered.
        pl.BlockSpec((tile_b, S), lambda i: (i, 0)),
        # Constant-index weight/bias blocks (DMA'd once, same block every step).
        pl.BlockSpec((S, H1p), lambda i: (0, 0)),
        pl.BlockSpec((1, H1p), lambda i: (0, 0)),
        pl.BlockSpec((H1p, H2p), lambda i: (0, 0)),
        pl.BlockSpec((1, H2p), lambda i: (0, 0)),
        pl.BlockSpec((H2p, Ap), lambda i: (0, 0)),
        pl.BlockSpec((1, Ap), lambda i: (0, 0)),
    ]
    out_specs = pl.BlockSpec((tile_b, Ap), lambda i: (i, 0))

    need = _working_set_bytes(tile_b, S, H1p, H2p, Ap)
    flops = 2 * B * (S * H1p + H1p * H2p + H2p * Ap)
    bytes_accessed = (
        B * S * 4
        + sum(int(a.size) * a.dtype.itemsize for a in (w1, b1, w2, b2, w3, b3))
        + B * Ap * 2
    )
    cost = pl.CostEstimate(
        flops=flops,
        transcendentals=2 * B * Ap,  # sigmoid = exp + reciprocal
        bytes_accessed=bytes_accessed,
    )

    out_padded = pl.pallas_call(
        actor_kernel,
        out_shape=jax.ShapeDtypeStruct((B, Ap), jnp.bfloat16),
        grid_spec=pl.GridSpec(grid=grid, in_specs=in_specs, out_specs=out_specs),
        compiler_params=pltpu.CompilerParams(
            dimension_semantics=("parallel",),
            vmem_limit_bytes=_vmem_limit_bytes(need, cap),
        ),
        cost_estimate=cost,
    )(x.astype(jnp.float32), w1, b1, w2, b2, w3, b3)

    # Slice off the padded action lanes and upcast to f32 (tiny output).
    return out_padded[:, :nb_actions].astype(jnp.float32)


# ----------------------------------------------------------------------------
# Synthetic init + pure-JAX reference
# ----------------------------------------------------------------------------
def init_actor_params(key, nb_states, nb_actions, hidden1=400, hidden2=300):
    """Deterministic synthetic init (PyTorch nn.Linear-style uniform fan-in)."""
    ks = jax.random.split(key, 6)

    def linear(kw, kb, fan_in, fan_out):
        bound = 1.0 / jnp.sqrt(fan_in)
        w = jax.random.uniform(kw, (fan_in, fan_out), jnp.float32, -bound, bound)
        b = jax.random.uniform(kb, (1, fan_out), jnp.float32, -bound, bound)
        return w, b

    w1, b1 = linear(ks[0], ks[1], nb_states, hidden1)
    w2, b2 = linear(ks[2], ks[3], hidden1, hidden2)
    w3, b3 = linear(ks[4], ks[5], hidden2, nb_actions)
    return {"w1": w1, "b1": b1, "w2": w2, "b2": b2, "w3": w3, "b3": b3}


def actor_ref(x, p):
    """Pure-JAX f32 reference for the correctness check."""
    h1 = jnp.maximum(x @ p["w1"] + p["b1"], 0.0)
    h2 = jnp.maximum(h1 @ p["w2"] + p["b2"], 0.0)
    return jax.nn.sigmoid(h2 @ p["w3"] + p["b3"])


if __name__ == "__main__":
    # Small shapes consistent with the module: 32 state features, hidden 64/48,
    # 8 actions.  Batch 128 -> auto tile picks 64 rows -> a 2-step (even)
    # "parallel" grid, exercising pipelining and v7x 2-TC sharding.
    B, nb_states, nb_actions = 128, 32, 8
    hidden1, hidden2 = 64, 48

    key = jax.random.PRNGKey(0)
    kx, kp = jax.random.split(key)
    x = jax.random.normal(kx, (B, nb_states), dtype=jnp.float32)
    params = init_actor_params(kp, nb_states, nb_actions, hidden1, hidden2)
    prepared = prepare_actor_params(params)

    out = actor_forward(x, prepared, nb_actions)
    out = jax.block_until_ready(out)

    ref = actor_ref(x, params)
    assert out.shape == (B, nb_actions)
    assert out.dtype == jnp.float32
    err = float(jnp.max(jnp.abs(out - ref)))
    # bf16 matmuls + bf16 output store vs f32 reference -> loose tolerance.
    assert err < 3e-2, f"mismatch vs reference: max abs err {err}"

    print("KERNEL_OK")
</pallas_src>

<mosaic_0001>
module attributes {stable_mosaic.version = 11 : i64} {
  func.func @actor_kernel(%arg0: i32, %arg1: memref<64x32xf32, #tpu.memory_space<vmem>>, %arg2: memref<32x128xbf16, #tpu.memory_space<vmem>>, %arg3: memref<1x128xf32, #tpu.memory_space<vmem>>, %arg4: memref<128x128xbf16, #tpu.memory_space<vmem>>, %arg5: memref<1x128xf32, #tpu.memory_space<vmem>>, %arg6: memref<128x128xbf16, #tpu.memory_space<vmem>>, %arg7: memref<1x128xf32, #tpu.memory_space<vmem>>, %arg8: memref<64x128xbf16, #tpu.memory_space<vmem>>) attributes {dimension_semantics = [#tpu.dimension_semantics<parallel>], iteration_bounds = array<i64: 2>, scalar_prefetch = 0 : i64, scratch_operands = 0 : i64, tpu.core_type = #tpu.core_type<tc>, window_params = [{transform_indices = @transform_0, window_bounds = array<i64: 64, 32>}, {pipeline_mode = #tpu.pipeline_mode<synchronous>, transform_indices = @transform_1, window_bounds = array<i64: 32, 128>}, {pipeline_mode = #tpu.pipeline_mode<synchronous>, transform_indices = @transform_2, window_bounds = array<i64: 1, 128>}, {pipeline_mode = #tpu.pipeline_mode<synchronous>, transform_indices = @transform_3, window_bounds = array<i64: 128, 128>}, {pipeline_mode = #tpu.pipeline_mode<synchronous>, transform_indices = @transform_4, window_bounds = array<i64: 1, 128>}, {pipeline_mode = #tpu.pipeline_mode<synchronous>, transform_indices = @transform_5, window_bounds = array<i64: 128, 128>}, {pipeline_mode = #tpu.pipeline_mode<synchronous>, transform_indices = @transform_6, window_bounds = array<i64: 1, 128>}, {transform_indices = @transform_7, window_bounds = array<i64: 64, 128>}]} {
    %c0 = arith.constant 0 : index
    %c0_0 = arith.constant 0 : index
    %0 = vector.load %arg1[%c0, %c0_0] : memref<64x32xf32, #tpu.memory_space<vmem>>, vector<64x32xf32>
    %1 = arith.truncf %0 : vector<64x32xf32> to vector<64x32xbf16>
    %c0_1 = arith.constant 0 : index
    %c0_2 = arith.constant 0 : index
    %2 = vector.load %arg2[%c0_1, %c0_2] : memref<32x128xbf16, #tpu.memory_space<vmem>>, vector<32x128xbf16>
    %cst = arith.constant dense<0.000000e+00> : vector<64x128xf32>
    %3 = tpu.matmul %1, %2, %cst {dimension_numbers = #tpu.dot_dimension_numbers<[1], [0], [0], [1], [0, 0, 1, 1], [], []>} : vector<64x32xbf16>, vector<32x128xbf16>, vector<64x128xf32> -> vector<64x128xf32>
    %c0_3 = arith.constant 0 : index
    %c0_4 = arith.constant 0 : index
    %4 = vector.load %arg3[%c0_3, %c0_4] : memref<1x128xf32, #tpu.memory_space<vmem>>, vector<1x128xf32>
    %5 = vector.broadcast %4 : vector<1x128xf32> to vector<64x128xf32>
    %6 = arith.addf %3, %5 : vector<64x128xf32>
    %cst_5 = arith.constant 0.000000e+00 : f32
    %7 = vector.broadcast %cst_5 : f32 to vector<64x128xf32>
    %8 = arith.maximumf %6, %7 : vector<64x128xf32>
    %9 = arith.truncf %8 : vector<64x128xf32> to vector<64x128xbf16>
    %c0_6 = arith.constant 0 : index
    %c0_7 = arith.constant 0 : index
    %10 = vector.load %arg4[%c0_6, %c0_7] : memref<128x128xbf16, #tpu.memory_space<vmem>>, vector<128x128xbf16>
    %cst_8 = arith.constant dense<0.000000e+00> : vector<64x128xf32>
    %11 = tpu.matmul %9, %10, %cst_8 {dimension_numbers = #tpu.dot_dimension_numbers<[1], [0], [0], [1], [0, 0, 1, 1], [], []>} : vector<64x128xbf16>, vector<128x128xbf16>, vector<64x128xf32> -> vector<64x128xf32>
    %c0_9 = arith.constant 0 : index
    %c0_10 = arith.constant 0 : index
    %12 = vector.load %arg5[%c0_9, %c0_10] : memref<1x128xf32, #tpu.memory_space<vmem>>, vector<1x128xf32>
    %13 = vector.broadcast %12 : vector<1x128xf32> to vector<64x128xf32>
    %14 = arith.addf %11, %13 : vector<64x128xf32>
    %cst_11 = arith.constant 0.000000e+00 : f32
    %15 = vector.broadcast %cst_11 : f32 to vector<64x128xf32>
    %16 = arith.maximumf %14, %15 : vector<64x128xf32>
    %17 = arith.truncf %16 : vector<64x128xf32> to vector<64x128xbf16>
    %c0_12 = arith.constant 0 : index
    %c0_13 = arith.constant 0 : index
    %18 = vector.load %arg6[%c0_12, %c0_13] : memref<128x128xbf16, #tpu.memory_space<vmem>>, vector<128x128xbf16>
    %cst_14 = arith.constant dense<0.000000e+00> : vector<64x128xf32>
    %19 = tpu.matmul %17, %18, %cst_14 {dimension_numbers = #tpu.dot_dimension_numbers<[1], [0], [0], [1], [0, 0, 1, 1], [], []>} : vector<64x128xbf16>, vector<128x128xbf16>, vector<64x128xf32> -> vector<64x128xf32>
    %c0_15 = arith.constant 0 : index
    %c0_16 = arith.constant 0 : index
    %20 = vector.load %arg7[%c0_15, %c0_16] : memref<1x128xf32, #tpu.memory_space<vmem>>, vector<1x128xf32>
    %21 = vector.broadcast %20 : vector<1x128xf32> to vector<64x128xf32>
    %22 = arith.addf %19, %21 : vector<64x128xf32>
    %23 = arith.negf %22 : vector<64x128xf32>
    %24 = math.exp %23 : vector<64x128xf32>
    %cst_17 = arith.constant 1.000000e+00 : f32
    %25 = vector.broadcast %cst_17 : f32 to vector<64x128xf32>
    %26 = arith.addf %25, %24 : vector<64x128xf32>
    %27 = arith.divf %25, %26 : vector<64x128xf32>
    %28 = arith.truncf %27 : vector<64x128xf32> to vector<64x128xbf16>
    %c0_18 = arith.constant 0 : index
    %c0_19 = arith.constant 0 : index
    %29 = vector.load %arg8[%c0_18, %c0_19] : memref<64x128xbf16, #tpu.memory_space<vmem>>, vector<64x128xbf16>
    tpu.vector_store %arg8[%c0_18, %c0_19], %28 {strides = array<i32>} : memref<64x128xbf16, #tpu.memory_space<vmem>>, vector<64x128xbf16>,
    return
  }
  func.func @transform_0(%arg0: i32) -> (i32, i32) {
    %c0_i32 = arith.constant 0 : i32
    %c0_i32_0 = arith.constant 0 : i32
    return %arg0, %c0_i32 : i32, i32
  }
  func.func @transform_1(%arg0: i32) -> (i32, i32) {
    %c0_i32 = arith.constant 0 : i32
    %c0_i32_0 = arith.constant 0 : i32
    %c0_i32_1 = arith.constant 0 : i32
    return %c0_i32, %c0_i32_0 : i32, i32
  }
  func.func @transform_2(%arg0: i32) -> (i32, i32) {
    %c0_i32 = arith.constant 0 : i32
    %c0_i32_0 = arith.constant 0 : i32
    %c0_i32_1 = arith.constant 0 : i32
    return %c0_i32, %c0_i32_0 : i32, i32
  }
  func.func @transform_3(%arg0: i32) -> (i32, i32) {
    %c0_i32 = arith.constant 0 : i32
    %c0_i32_0 = arith.constant 0 : i32
    %c0_i32_1 = arith.constant 0 : i32
    return %c0_i32, %c0_i32_0 : i32, i32
  }
  func.func @transform_4(%arg0: i32) -> (i32, i32) {
    %c0_i32 = arith.constant 0 : i32
    %c0_i32_0 = arith.constant 0 : i32
    %c0_i32_1 = arith.constant 0 : i32
    return %c0_i32, %c0_i32_0 : i32, i32
  }
  func.func @transform_5(%arg0: i32) -> (i32, i32) {
    %c0_i32 = arith.constant 0 : i32
    %c0_i32_0 = arith.constant 0 : i32
    %c0_i32_1 = arith.constant 0 : i32
    return %c0_i32, %c0_i32_0 : i32, i32
  }
  func.func @transform_6(%arg0: i32) -> (i32, i32) {
    %c0_i32 = arith.constant 0 : i32
    %c0_i32_0 = arith.constant 0 : i32
    %c0_i32_1 = arith.constant 0 : i32
    return %c0_i32, %c0_i32_0 : i32, i32
  }
  func.func @transform_7(%arg0: i32) -> (i32, i32) {
    %c0_i32 = arith.constant 0 : i32
    %c0_i32_0 = arith.constant 0 : i32
    return %arg0, %c0_i32 : i32, i32
  }
}

</mosaic_0001>

<llo_original>
// kernel: tpu_custom_call.1
$region0: #{tpu_custom_call.1}
  #allocation0 [shape = 'u32[]', space=smem, size = 0x4, offset = 0x4, fixed_abs, tag = 'smem constant byte address 0x4 - core index']
  #allocation1 [shape = 'u32[72,128]{1,0:T(1,128)}', space=vmem, size = 0x9000, scoped, tag = 'internal scratch']
  %s0 = inlined_call_operand.vmem [shape: f32[128,32], index: 0, kind: input, shape index: {}]
  %s1 = inlined_call_operand.vmem [shape: bf16[32,128], index: 1, kind: input, shape index: {}]
  %s2 = inlined_call_operand.vmem [shape: f32[1,128], index: 2, kind: input, shape index: {}]
  %s3 = inlined_call_operand.vmem [shape: bf16[128,128], index: 3, kind: input, shape index: {}]
  %s4 = inlined_call_operand.vmem [shape: f32[1,128], index: 4, kind: input, shape index: {}]
  %s5 = inlined_call_operand.vmem [shape: bf16[128,128], index: 5, kind: input, shape index: {}]
  %s6 = inlined_call_operand.vmem [shape: f32[1,128], index: 6, kind: input, shape index: {}]
  %s7 = inlined_call_operand.hbm [shape: bf16[128,128], index: 7, kind: output, shape index: {}]
  %s8 = sld [smem:[#allocation0]]
  $region61: #{tpu_custom_call.1} parent=0
    _
  %s10 = ssub.s32 1, %s8
  %s11 = scalar_select 0, %s10, %s8
  $region1: #{tpu_custom_call.1} parent=0
    #allocation2 [shape = 'u8[32768]{0}', space=vmem, size = 0x8000, scoped, tag = 'output window, operand 0']
    #allocation3 [shape = 's32[2]{0}', space=sflag, size = 0x8, scoped, tag = 'scoped memory for tpu_custom_call.1']
    %12 = vsyncpa [#allocation3], 0
    %s13 = scalar_lea.sflag [#allocation3], 1
    %14 = vsyncpa %s13, 0
    loop: start=0, step=1, limit=4
    $region2: #{tpu_custom_call.1} parent=1 // loop_pre_header
      _
    $region3: #{tpu_custom_call.1} parent=1 // loop_header
      %s16 = sphi 0, %s20
      %p17 = scmp.ge.s32.totalorder %s16, 4
      %s26 = sphi 0, %s28
      %s29 = sphi 0, %s26
      %s30 = sphi 0, %s29
      %s46 = sphi 0, %s30
      %s50 = sphi 0, %s50
      %s52 = sphi 0, %s50
      %s53 = sphi 0, %s52
      %s67 = sphi 0, %s53
      %s71 = sphi 0, %s71
      %s73 = sphi 0, %s71
      %s74 = sphi 0, %s73
      %s88 = sphi 0, %s74
      %s92 = sphi 0, %s92
      %s94 = sphi 0, %s92
      %s95 = sphi 0, %s94
      %s109 = sphi 0, %s95
      %s113 = sphi 0, %s113
      %s115 = sphi 0, %s113
      %s116 = sphi 0, %s115
      %s130 = sphi 0, %s116
      %s134 = sphi 0, %s134
      %s136 = sphi 0, %s134
      %s137 = sphi 0, %s136
      %s151 = sphi 0, %s137
      %s155 = sphi 0, %s155
      %s157 = sphi 0, %s155
      %s158 = sphi 0, %s157
      %s172 = sphi 0, %s158
      %s178 = sphi 0, %s180
      %s181 = sphi 0, %s178
      %s182 = sphi 0, %s181
      %s198 = sphi 0, %s182
    $region4: #{tpu_custom_call.1} parent=1 // loop_header_branch
      %19 = sbr.rel (%p17) target = $region8
    $region5: #{tpu_custom_call.1} parent=1 // loop_body
      %s21 = ssub.s32 %s16, 1
      %s22 = ssub.s32 %s16, 2
      %s23 = sadd.s32 %s16, 1
      %s24 = ssub.s32 %s16, %s23
      %p25 = scmp.eq.s32.totalorder %s24, 0
      %s27 = sadd.s32 %s26, 1
      %s28 = scalar_select %p25, %s26, %s27
      %p31 = pneg %p25
      %p32 = scmp.eq.s32.totalorder %s16, 1
      %p33 = por %p31, %p32
      %p34 = scmp.ne.s32.totalorder %s26, %s29
      %p35 = scmp.eq.s32.totalorder %s16, 0
      %p36 = por %p34, %p35
      %p37 = scmp.ne.s32.totalorder %s26, %s29
      %p38 = scmp.eq.s32.totalorder %s21, 1
      %p39 = por %p37, %p38
      %p40 = scmp.ne.s32.totalorder %s29, %s30
      %p41 = scmp.eq.s32.totalorder %s21, 0
      %p42 = por %p40, %p41
      %p43 = scmp.ne.s32.totalorder %s29, %s30
      %p44 = scmp.eq.s32.totalorder %s22, 1
      %p45 = por %p43, %p44
      %p47 = scmp.ne.s32.totalorder %s30, %s46
      %p48 = scmp.eq.s32.totalorder %s22, 0
      %p49 = por %p47, %p48
      %s51 = sadd.s32 %s50, 1
      %p54 = scmp.eq.s32.totalorder %s16, 1
      %p55 = scmp.ne.s32.totalorder %s50, %s52
      %p56 = scmp.eq.s32.totalorder %s16, 0
      %p57 = por %p55, %p56
      %p58 = scmp.ne.s32.totalorder %s50, %s52
      %p59 = scmp.eq.s32.totalorder %s21, 1
      %p60 = por %p58, %p59
      %p61 = scmp.ne.s32.totalorder %s52, %s53
      %p62 = scmp.eq.s32.totalorder %s21, 0
      %p63 = por %p61, %p62
      %p64 = scmp.ne.s32.totalorder %s52, %s53
      %p65 = scmp.eq.s32.totalorder %s22, 1
      %p66 = por %p64, %p65
      %p68 = scmp.ne.s32.totalorder %s53, %s67
      %p69 = scmp.eq.s32.totalorder %s22, 0
      %p70 = por %p68, %p69
      %s72 = sadd.s32 %s71, 1
      %p75 = scmp.eq.s32.totalorder %s16, 1
      %p76 = scmp.ne.s32.totalorder %s71, %s73
      %p77 = scmp.eq.s32.totalorder %s16, 0
      %p78 = por %p76, %p77
      %p79 = scmp.ne.s32.totalorder %s71, %s73
      %p80 = scmp.eq.s32.totalorder %s21, 1
      %p81 = por %p79, %p80
      %p82 = scmp.ne.s32.totalorder %s73, %s74
      %p83 = scmp.eq.s32.totalorder %s21, 0
      %p84 = por %p82, %p83
      %p85 = scmp.ne.s32.totalorder %s73, %s74
      %p86 = scmp.eq.s32.totalorder %s22, 1
      %p87 = por %p85, %p86
      %p89 = scmp.ne.s32.totalorder %s74, %s88
      %p90 = scmp.eq.s32.totalorder %s22, 0
      %p91 = por %p89, %p90
      %s93 = sadd.s32 %s92, 1
      %p96 = scmp.eq.s32.totalorder %s16, 1
      %p97 = scmp.ne.s32.totalorder %s92, %s94
      %p98 = scmp.eq.s32.totalorder %s16, 0
      %p99 = por %p97, %p98
      %p100 = scmp.ne.s32.totalorder %s92, %s94
      %p101 = scmp.eq.s32.totalorder %s21, 1
      %p102 = por %p100, %p101
      %p103 = scmp.ne.s32.totalorder %s94, %s95
      %p104 = scmp.eq.s32.totalorder %s21, 0
      %p105 = por %p103, %p104
      %p106 = scmp.ne.s32.totalorder %s94, %s95
      %p107 = scmp.eq.s32.totalorder %s22, 1
      %p108 = por %p106, %p107
      %p110 = scmp.ne.s32.totalorder %s95, %s109
      %p111 = scmp.eq.s32.totalorder %s22, 0
      %p112 = por %p110, %p111
      %s114 = sadd.s32 %s113, 1
      %p117 = scmp.eq.s32.totalorder %s16, 1
      %p118 = scmp.ne.s32.totalorder %s113, %s115
      %p119 = scmp.eq.s32.totalorder %s16, 0
      %p120 = por %p118, %p119
      %p121 = scmp.ne.s32.totalorder %s113, %s115
      %p122 = scmp.eq.s32.totalorder %s21, 1
      %p123 = por %p121, %p122
      %p124 = scmp.ne.s32.totalorder %s115, %s116
      %p125 = scmp.eq.s32.totalorder %s21, 0
      %p126 = por %p124, %p125
      %p127 = scmp.ne.s32.totalorder %s115, %s116
      %p128 = scmp.eq.s32.totalorder %s22, 1
      %p129 = por %p127, %p128
      %p131 = scmp.ne.s32.totalorder %s116, %s130
      %p132 = scmp.eq.s32.totalorder %s22, 0
      %p133 = por %p131, %p132
      %s135 = sadd.s32 %s134, 1
      %p138 = scmp.eq.s32.totalorder %s16, 1
      %p139 = scmp.ne.s32.totalorder %s134, %s136
      %p140 = scmp.eq.s32.totalorder %s16, 0
      %p141 = por %p139, %p140
      %p142 = scmp.ne.s32.totalorder %s134, %s136
      %p143 = scmp.eq.s32.totalorder %s21, 1
      %p144 = por %p142, %p143
      %p145 = scmp.ne.s32.totalorder %s136, %s137
      %p146 = scmp.eq.s32.totalorder %s21, 0
      %p147 = por %p145, %p146
      %p148 = scmp.ne.s32.totalorder %s136, %s137
      %p149 = scmp.eq.s32.totalorder %s22, 1
      %p150 = por %p148, %p149
      %p152 = scmp.ne.s32.totalorder %s137, %s151
      %p153 = scmp.eq.s32.totalorder %s22, 0
      %p154 = por %p152, %p153
      %s156 = sadd.s32 %s155, 1
      %p159 = scmp.eq.s32.totalorder %s16, 1
      %p160 = scmp.ne.s32.totalorder %s155, %s157
      %p161 = scmp.eq.s32.totalorder %s16, 0
      %p162 = por %p160, %p161
      %p163 = scmp.ne.s32.totalorder %s155, %s157
      %p164 = scmp.eq.s32.totalorder %s21, 1
      %p165 = por %p163, %p164
      %p166 = scmp.ne.s32.totalorder %s157, %s158
      %p167 = scmp.eq.s32.totalorder %s21, 0
      %p168 = por %p166, %p167
      %p169 = scmp.ne.s32.totalorder %s157, %s158
      %p170 = scmp.eq.s32.totalorder %s22, 1
      %p171 = por %p169, %p170
      %p173 = scmp.ne.s32.totalorder %s158, %s172
      %p174 = scmp.eq.s32.totalorder %s22, 0
      %p175 = por %p173, %p174
      %s176 = ssub.s32 %s16, %s23
      %p177 = scmp.eq.s32.totalorder %s176, 0
      %s179 = sadd.s32 %s178, 1
      %s180 = scalar_select %p177, %s178, %s179
      %p183 = pneg %p177
      %p184 = scmp.eq.s32.totalorder %s16, 1
      %p185 = por %p183, %p184
      %p186 = scmp.ne.s32.totalorder %s178, %s181
      %p187 = scmp.eq.s32.totalorder %s16, 0
      %p188 = por %p186, %p187
      %p189 = scmp.ne.s32.totalorder %s178, %s181
      %p190 = scmp.eq.s32.totalorder %s21, 1
      %p191 = por %p189, %p190
      %p192 = scmp.ne.s32.totalorder %s181, %s182
      %p193 = scmp.eq.s32.totalorder %s21, 0
      %p194 = por %p192, %p193
      %p195 = scmp.ne.s32.totalorder %s181, %s182
      %p196 = scmp.eq.s32.totalorder %s22, 1
      %p197 = por %p195, %p196
      %p199 = scmp.ne.s32.totalorder %s182, %s198
      %p200 = scmp.eq.s32.totalorder %s22, 0
      %p201 = por %p199, %p200
      %p202 = scmp.le.s32.totalorder 1, %s16
      %p203 = scmp.lt.s32.totalorder %s16, 3
      %p204 = pnand %p202, %p203
      %p205 = pneg %p204
      // Predicated region
      $region9: #{tpu_custom_call.1} parent=5 // pred_check
        _
      $region10: #{tpu_custom_call.1} parent=5 // pred_check_branch
        %207 = sbr.rel (%p204) target = $region12
      $region11: #{tpu_custom_call.1} parent=5 // pred_region
        %s208 = ssub.s32 %s16, 1
        // Predicated region
        $region13: #{tpu_custom_call.1} parent=11 // pred_check
          %p209 = pneg %p63
        $region14: #{tpu_custom_call.1} parent=11 // pred_check_branch
          %211 = sbr.rel (%p209) target = $region16
        $region15: #{tpu_custom_call.1} parent=11 // pred_region
          _
        $region16: #{tpu_custom_call.1} parent=11 // pred_fallthru
          _
        // Predicated region
        $region17: #{tpu_custom_call.1} parent=11 // pred_check
          %p212 = pneg %p84
        $region18: #{tpu_custom_call.1} parent=11 // pred_check_branch
          %214 = sbr.rel (%p212) target = $region20
        $region19: #{tpu_custom_call.1} parent=11 // pred_region
          _
        $region20: #{tpu_custom_call.1} parent=11 // pred_fallthru
          _
        // Predicated region
        $region21: #{tpu_custom_call.1} parent=11 // pred_check
          %p215 = pneg %p105
        $region22: #{tpu_custom_call.1} parent=11 // pred_check_branch
          %217 = sbr.rel (%p215) target = $region24
        $region23: #{tpu_custom_call.1} parent=11 // pred_region
          _
        $region24: #{tpu_custom_call.1} parent=11 // pred_fallthru
          _
        // Predicated region
        $region25: #{tpu_custom_call.1} parent=11 // pred_check
          %p218 = pneg %p126
        $region26: #{tpu_custom_call.1} parent=11 // pred_check_branch
          %220 = sbr.rel (%p218) target = $region28
        $region27: #{tpu_custom_call.1} parent=11 // pred_region
          _
        $region28: #{tpu_custom_call.1} parent=11 // pred_fallthru
          _
        // Predicated region
        $region29: #{tpu_custom_call.1} parent=11 // pred_check
          %p221 = pneg %p147
        $region30: #{tpu_custom_call.1} parent=11 // pred_check_branch
          %223 = sbr.rel (%p221) target = $region32
        $region31: #{tpu_custom_call.1} parent=11 // pred_region
          _
        $region32: #{tpu_custom_call.1} parent=11 // pred_fallthru
          _
        // Predicated region
        $region33: #{tpu_custom_call.1} parent=11 // pred_check
          %p224 = pneg %p168
        $region34: #{tpu_custom_call.1} parent=11 // pred_check_branch
          %226 = sbr.rel (%p224) target = $region36
        $region35: #{tpu_custom_call.1} parent=11 // pred_region
          _
        $region36: #{tpu_custom_call.1} parent=11 // pred_fallthru
          _
      $region12: #{tpu_custom_call.1} parent=5 // pred_fallthru
        _
      %p227 = scmp.lt.s32.totalorder %s16, 2
      // Predicated region
      $region37: #{tpu_custom_call.1} parent=5 // pred_check
        %p228 = pneg %p227
      $region38: #{tpu_custom_call.1} parent=5 // pred_check_branch
        %230 = sbr.rel (%p228) target = $region40
      $region39: #{tpu_custom_call.1} parent=5 // pred_region
        // Predicated region
        $region41: #{tpu_custom_call.1} parent=39 // pred_check
          %p231 = pneg %p36
        $region42: #{tpu_custom_call.1} parent=39 // pred_check_branch
          %233 = sbr.rel (%p231) target = $region44
        $region43: #{tpu_custom_call.1} parent=39 // pred_region
          %s234 = smul.u32 8, %s16
          %p235 = scmp.lt.s32.totalorder %s234, 15
          %s236 = scalar_select %p235, %s234, 15
          %s237 = smul.addr %s236, 8
          %s238 = scalar_lea.vmem %s0, %s237
          %s239 = smul.u32 8, %s16
        $region44: #{tpu_custom_call.1} parent=39 // pred_fallthru
          _
      $region40: #{tpu_custom_call.1} parent=5 // pred_fallthru
        _
      %p240 = scmp.le.s32.totalorder 1, %s16
      %p241 = scmp.lt.s32.totalorder %s16, 3
      %p242 = pnand %p240, %p241
      %p243 = pneg %p242
      // Predicated region
      $region45: #{tpu_custom_call.1} parent=5 // pred_check
        _
      $region46: #{tpu_custom_call.1} parent=5 // pred_check_branch
        %245 = sbr.rel (%p242) target = $region48
      $region47: #{tpu_custom_call.1} parent=5 // pred_region
        %s246 = ssub.s32 %s16, 1
        %s247 = smul.u32 8, %s21
        %p248 = scmp.lt.s32.totalorder %s247, 15
        %s249 = scalar_select %p248, %s247, 15
        %s250 = smul.addr %s249, 8
        %s251 = scalar_lea.vmem %s0, %s250
        %p252 = pneg %p42
        %p253 = pneg %p39
        %p254 = pneg %p63
        %p255 = pneg %p60
        %p256 = pneg %p84
        %p257 = pneg %p81
        %p258 = pneg %p105
        %p259 = pneg %p102
        %p260 = pneg %p126
        %p261 = pneg %p123
        %p262 = pneg %p147
        %p263 = pneg %p144
        %p264 = pneg %p168
        %p265 = pneg %p165
        %p266 = pneg %p194
        %p267 = pneg %p191
        %s268 = sand.u32 %s181, 1
        %s269 = scalar_lea.sflag [#allocation3], %s268
        %s270 = sand.u32 %s181, 1
        %s271 = smul.addr %s270, 32
        %s272 = scalar_lea.vmem [#allocation2], %s271
        %s273 = smul.u32 8, %s21
        %p274 = scmp.lt.s32.totalorder %s273, 15
        %s275 = scalar_select %p274, %s273, 15
        %s276 = smul.addr %s275, 8
        %s277 = scalar_lea.vmem %s0, %s276
        %s278 = smul.u32 8, %s21
        %s279 = smul.u32 8, %s21
        %v281 = vld [vmem:[%s277] sm:$0xff]
        %v282 = vld [vmem:[%s277 + $0x8] sm:$0xff]
        %v283 = vld [vmem:[%s277 + $0x10] sm:$0xff]
        %v284 = vld [vmem:[%s277 + $0x18] sm:$0xff]
        %v285 = vld [vmem:[%s277 + $0x20] sm:$0xff]
        %v286 = vld [vmem:[%s277 + $0x28] sm:$0xff]
        %v287 = vld [vmem:[%s277 + $0x30] sm:$0xff]
        %v288 = vld [vmem:[%s277 + $0x38] sm:$0xff]
        %v289 = vpack.c.bf16 %v282, %v281
        %v290 = vpack.c.bf16 %v284, %v283
        %v291 = vpack.c.bf16 %v286, %v285
        %v292 = vpack.c.bf16 %v288, %v287
        %v293 = vld [vmem:[%s1] sm:$0xf]
        %v294 = vld [vmem:[%s1 + $0x4] sm:$0xf]
        %v295 = vld [vmem:[%s1 + $0x8] sm:$0xf]
        %v296 = vld [vmem:[%s1 + $0xc] sm:$0xf]
        %v297 = vld [vmem:[%s2] sm:$0x1]
        %v299 = vperm.slane %v297, 0
        %v305 = vunpack.c.l.b16 %v293
        %v306 = vunpack.c.l.b16 %v294
        %v307 = vunpack.c.l.b16 %v295
        %v308 = vunpack.c.l.b16 %v296
        %v309 = vpack.c.b16 %v306, %v305
        %v310 = vpack.c.b16 %v308, %v307
        %vm313 = vcmask 261120
        %v315 = vsel %vm313, %v289, 0
        %v318 = vsel %vm313, %v290, 0
        %v321 = vsel %vm313, %v291, 0
        %v324 = vsel %vm313, %v292, 0
        %326 = vmatpush.bf16.msra.mxu0 0
        %327 = vmatpush.bf16.msra.mxu0 0
        %328 = vmatpush.bf16.msra.mxu0 0
        %329 = vmatpush.bf16.msra.mxu0 0
        %330 = vmatpush.bf16.msra.mxu0 0
        %331 = vmatpush.bf16.msra.mxu0 0
        %332 = vmatpush.bf16.msra.mxu0 %v310
        %333 = vmatpush.bf16.msra.mxu0 %v309
        %334 = vmatmul.bf16.gmra.mxu0 %v315
        %v335 = vpop.f32.mrf.mxu0
        %v336 = vadd.f32 %v299, %v335
        %v337 = vpop.f32.mrf.mxu0
        %v338 = vadd.f32 %v299, %v337
        %339 = vmatmul.bf16.gmra.mxu0 %v318
        %v340 = vpop.f32.mrf.mxu0
        %v341 = vadd.f32 %v299, %v340
        %v342 = vpop.f32.mrf.mxu0
        %v343 = vadd.f32 %v299, %v342
        %344 = vmatmul.bf16.gmra.mxu0 %v321
        %v345 = vpop.f32.mrf.mxu0
        %v346 = vadd.f32 %v299, %v345
        %v347 = vpop.f32.mrf.mxu0
        %v348 = vadd.f32 %v299, %v347
        %349 = vmatmul.bf16.gmra.mxu0 %v324
        %v350 = vpop.f32.mrf.mxu0
        %v351 = vadd.f32 %v299, %v350
        %v352 = vpop.f32.mrf.mxu0
        %v353 = vadd.f32 %v299, %v352
        %354 = vdwg.mxu0
        %v355 = vmax.f32 %v336, 0.0
        %v356 = vmax.f32 %v338, 0.0
        %v357 = vmax.f32 %v341, 0.0
        %v358 = vmax.f32 %v343, 0.0
        %v359 = vmax.f32 %v346, 0.0
        %v360 = vmax.f32 %v348, 0.0
        %v361 = vmax.f32 %v351, 0.0
        %v362 = vmax.f32 %v353, 0.0
        %v363 = vpack.c.bf16 %v356, %v355
        %v364 = vpack.c.bf16 %v358, %v357
        %v365 = vpack.c.bf16 %v360, %v359
        %v366 = vpack.c.bf16 %v362, %v361
        %v367 = vld [vmem:[%s3] sm:$0xf]
        %v368 = vld [vmem:[%s3 + $0x4] sm:$0xf]
        %v369 = vld [vmem:[%s3 + $0x8] sm:$0xf]
        %v370 = vld [vmem:[%s3 + $0xc] sm:$0xf]
        %v371 = vld [vmem:[%s3 + $0x10] sm:$0xf]
        %v372 = vld [vmem:[%s3 + $0x14] sm:$0xf]
        %v373 = vld [vmem:[%s3 + $0x18] sm:$0xf]
        %v374 = vld [vmem:[%s3 + $0x1c] sm:$0xf]
        %v375 = vld [vmem:[%s3 + $0x20] sm:$0xf]
        %v376 = vld [vmem:[%s3 + $0x24] sm:$0xf]
        %v377 = vld [vmem:[%s3 + $0x28] sm:$0xf]
        %v378 = vld [vmem:[%s3 + $0x2c] sm:$0xf]
        %v379 = vld [vmem:[%s3 + $0x30] sm:$0xf]
        %v380 = vld [vmem:[%s3 + $0x34] sm:$0xf]
        %v381 = vld [vmem:[%s3 + $0x38] sm:$0xf]
        %v382 = vld [vmem:[%s3 + $0x3c] sm:$0xf]
        %v383 = vld [vmem:[%s4] sm:$0x1]
        %v385 = vperm.slane %v383, 0
        %v403 = vunpack.c.l.b16 %v367
        %v404 = vunpack.c.l.b16 %v368
        %v405 = vunpack.c.l.b16 %v369
        %v406 = vunpack.c.l.b16 %v370
        %v407 = vunpack.c.l.b16 %v371
        %v408 = vunpack.c.l.b16 %v372
        %v409 = vunpack.c.l.b16 %v373
        %v410 = vunpack.c.l.b16 %v374
        %v411 = vunpack.c.l.b16 %v375
        %v412 = vunpack.c.l.b16 %v376
        %v413 = vunpack.c.l.b16 %v377
        %v414 = vunpack.c.l.b16 %v378
        %v415 = vunpack.c.l.b16 %v379
        %v416 = vunpack.c.l.b16 %v380
        %v417 = vunpack.c.l.b16 %v381
        %v418 = vunpack.c.l.b16 %v382
        %v419 = vpack.c.b16 %v404, %v403
        %v420 = vpack.c.b16 %v406, %v405
        %v421 = vpack.c.b16 %v408, %v407
        %v422 = vpack.c.b16 %v410, %v409
        %v423 = vpack.c.b16 %v412, %v411
        %v424 = vpack.c.b16 %v414, %v413
        %v425 = vpack.c.b16 %v416, %v415
        %v426 = vpack.c.b16 %v418, %v417
        %435 = vmatpush.bf16.msra.mxu0 %v426
        %436 = vmatpush.bf16.msra.mxu0 %v425
        %437 = vmatpush.bf16.msra.mxu0 %v424
        %438 = vmatpush.bf16.msra.mxu0 %v423
        %439 = vmatpush.bf16.msra.mxu0 %v422
        %440 = vmatpush.bf16.msra.mxu0 %v421
        %441 = vmatpush.bf16.msra.mxu0 %v420
        %442 = vmatpush.bf16.msra.mxu0 %v419
        %443 = vmatmul.bf16.gmra.mxu0 %v363
        %v444 = vpop.f32.mrf.mxu0
        %v445 = vadd.f32 %v385, %v444
        %v446 = vpop.f32.mrf.mxu0
        %v447 = vadd.f32 %v385, %v446
        %448 = vmatmul.bf16.gmra.mxu0 %v364
        %v449 = vpop.f32.mrf.mxu0
        %v450 = vadd.f32 %v385, %v449
        %v451 = vpop.f32.mrf.mxu0
        %v452 = vadd.f32 %v385, %v451
        %453 = vmatmul.bf16.gmra.mxu0 %v365
        %v454 = vpop.f32.mrf.mxu0
        %v455 = vadd.f32 %v385, %v454
        %v456 = vpop.f32.mrf.mxu0
        %v457 = vadd.f32 %v385, %v456
        %458 = vmatmul.bf16.gmra.mxu0 %v366
        %v459 = vpop.f32.mrf.mxu0
        %v460 = vadd.f32 %v385, %v459
        %v461 = vpop.f32.mrf.mxu0
        %v462 = vadd.f32 %v385, %v461
        %463 = vdwg.mxu0
        %v464 = vmax.f32 %v445, 0.0
        %v465 = vmax.f32 %v447, 0.0
        %v466 = vmax.f32 %v450, 0.0
        %v467 = vmax.f32 %v452, 0.0
        %v468 = vmax.f32 %v455, 0.0
        %v469 = vmax.f32 %v457, 0.0
        %v470 = vmax.f32 %v460, 0.0
        %v471 = vmax.f32 %v462, 0.0
        %v472 = vpack.c.bf16 %v465, %v464
        %v473 = vpack.c.bf16 %v467, %v466
        %v474 = vpack.c.bf16 %v469, %v468
        %v475 = vpack.c.bf16 %v471, %v470
        %v476 = vld [vmem:[%s5] sm:$0xf]
        %v477 = vld [vmem:[%s5 + $0x4] sm:$0xf]
        %v478 = vld [vmem:[%s5 + $0x8] sm:$0xf]
        %v479 = vld [vmem:[%s5 + $0xc] sm:$0xf]
        %v480 = vld [vmem:[%s5 + $0x10] sm:$0xf]
        %v481 = vld [vmem:[%s5 + $0x14] sm:$0xf]
        %v482 = vld [vmem:[%s5 + $0x18] sm:$0xf]
        %v483 = vld [vmem:[%s5 + $0x1c] sm:$0xf]
        %v484 = vld [vmem:[%s5 + $0x20] sm:$0xf]
        %v485 = vld [vmem:[%s5 + $0x24] sm:$0xf]
        %v486 = vld [vmem:[%s5 + $0x28] sm:$0xf]
        %v487 = vld [vmem:[%s5 + $0x2c] sm:$0xf]
        %v488 = vld [vmem:[%s5 + $0x30] sm:$0xf]
        %v489 = vld [vmem:[%s5 + $0x34] sm:$0xf]
        %v490 = vld [vmem:[%s5 + $0x38] sm:$0xf]
        %v491 = vld [vmem:[%s5 + $0x3c] sm:$0xf]
        %v492 = vld [vmem:[%s6] sm:$0x1]
        %v494 = vperm.slane %v492, 0
        %v512 = vunpack.c.l.b16 %v476
        %v513 = vunpack.c.l.b16 %v477
        %v514 = vunpack.c.l.b16 %v478
        %v515 = vunpack.c.l.b16 %v479
        %v516 = vunpack.c.l.b16 %v480
        %v517 = vunpack.c.l.b16 %v481
        %v518 = vunpack.c.l.b16 %v482
        %v519 = vunpack.c.l.b16 %v483
        %v520 = vunpack.c.l.b16 %v484
        %v521 = vunpack.c.l.b16 %v485
        %v522 = vunpack.c.l.b16 %v486
        %v523 = vunpack.c.l.b16 %v487
        %v524 = vunpack.c.l.b16 %v488
        %v525 = vunpack.c.l.b16 %v489
        %v526 = vunpack.c.l.b16 %v490
        %v527 = vunpack.c.l.b16 %v491
        %v528 = vpack.c.b16 %v513, %v512
        %v529 = vpack.c.b16 %v515, %v514
        %v530 = vpack.c.b16 %v517, %v516
        %v531 = vpack.c.b16 %v519, %v518
        %v532 = vpack.c.b16 %v521, %v520
        %v533 = vpack.c.b16 %v523, %v522
        %v534 = vpack.c.b16 %v525, %v524
        %v535 = vpack.c.b16 %v527, %v526
        %544 = vmatpush.bf16.msra.mxu0 %v535
        %545 = vmatpush.bf16.msra.mxu0 %v534
        %546 = vmatpush.bf16.msra.mxu0 %v533
        %547 = vmatpush.bf16.msra.mxu0 %v532
        %548 = vmatpush.bf16.msra.mxu0 %v531
        %549 = vmatpush.bf16.msra.mxu0 %v530
        %550 = vmatpush.bf16.msra.mxu0 %v529
        %551 = vmatpush.bf16.msra.mxu0 %v528
        %552 = vmatmul.bf16.gmra.mxu0 %v472
        %v553 = vpop.f32.mrf.mxu0
        %v554 = vadd.f32 %v494, %v553
        %v555 = vpop.f32.mrf.mxu0
        %v556 = vadd.f32 %v494, %v555
        %557 = vmatmul.bf16.gmra.mxu0 %v473
        %v558 = vpop.f32.mrf.mxu0
        %v559 = vadd.f32 %v494, %v558
        %v560 = vpop.f32.mrf.mxu0
        %v561 = vadd.f32 %v494, %v560
        %562 = vmatmul.bf16.gmra.mxu0 %v474
        %v563 = vpop.f32.mrf.mxu0
        %v564 = vadd.f32 %v494, %v563
        %v565 = vpop.f32.mrf.mxu0
        %v566 = vadd.f32 %v494, %v565
        %567 = vmatmul.bf16.gmra.mxu0 %v475
        %v568 = vpop.f32.mrf.mxu0
        %v569 = vadd.f32 %v494, %v568
        %v570 = vpop.f32.mrf.mxu0
        %v571 = vadd.f32 %v494, %v570
        %572 = vdwg.mxu0
        %v573 = vxor.u32 %v554, 2147483648
        %v574 = vxor.u32 %v556, 2147483648
        %v575 = vxor.u32 %v559, 2147483648
        %v576 = vxor.u32 %v561, 2147483648
        %v577 = vxor.u32 %v564, 2147483648
        %v578 = vxor.u32 %v566, 2147483648
        %v579 = vxor.u32 %v569, 2147483648
        %v580 = vxor.u32 %v571, 2147483648
        %v581 = vmul.f32 %v573, 1.442695
        %v582 = vpow.pop %v581
        %v583 = vmul.f32 %v574, 1.442695
        %v584 = vpow.pop %v583
        %v585 = vmul.f32 %v575, 1.442695
        %v586 = vpow.pop %v585
        %v587 = vmul.f32 %v576, 1.442695
        %v588 = vpow.pop %v587
        %v589 = vmul.f32 %v577, 1.442695
        %v590 = vpow.pop %v589
        %v591 = vmul.f32 %v578, 1.442695
        %v592 = vpow.pop %v591
        %v593 = vmul.f32 %v579, 1.442695
        %v594 = vpow.pop %v593
        %v595 = vmul.f32 %v580, 1.442695
        %v596 = vpow.pop %v595
        %v597 = vadd.f32 %v582, 1.0
        %v598 = vadd.f32 %v584, 1.0
        %v599 = vadd.f32 %v586, 1.0
        %v600 = vadd.f32 %v588, 1.0
        %v601 = vadd.f32 %v590, 1.0
        %v602 = vadd.f32 %v592, 1.0
        %v603 = vadd.f32 %v594, 1.0
        %v604 = vadd.f32 %v596, 1.0
        %v605 = vrcp.pop %v597
        %v606 = vmul.f32 %v597, %v605
        %v607 = vsub.f32 1.0, %v606
        %v608 = vmul.f32 %v605, %v607
        %v609 = vadd.f32 %v605, %v608
        %vm610 = vweird.f32 %v597
        %vm611 = vweird.f32 %v605
        %vm612 = vmor %vm610, %vm611
        %v613 = vsel %vm612, %v605, %v609
        %v614 = vand.u32 2147483647, %v597
        %vm615 = vcmp.eq.f32.partialorder %v614, 8.507059e+37
        %v616 = vand.u32 %v597, 2147483648
        %v617 = vor.u32 1.1754944e-38, %v616
        %v618 = vsel %vm615, %v617, %v613
        %v619 = vmul.f32 1.0, %v618
        %v620 = vrcp.pop %v598
        %v621 = vmul.f32 %v598, %v620
        %v622 = vsub.f32 1.0, %v621
        %v623 = vmul.f32 %v620, %v622
        %v624 = vadd.f32 %v620, %v623
        %vm625 = vweird.f32 %v598
        %vm626 = vweird.f32 %v620
        %vm627 = vmor %vm625, %vm626
        %v628 = vsel %vm627, %v620, %v624
        %v629 = vand.u32 2147483647, %v598
        %vm630 = vcmp.eq.f32.partialorder %v629, 8.507059e+37
        %v631 = vand.u32 %v598, 2147483648
        %v632 = vor.u32 1.1754944e-38, %v631
        %v633 = vsel %vm630, %v632, %v628
        %v634 = vmul.f32 1.0, %v633
        %v635 = vrcp.pop %v599
        %v636 = vmul.f32 %v599, %v635
        %v637 = vsub.f32 1.0, %v636
        %v638 = vmul.f32 %v635, %v637
        %v639 = vadd.f32 %v635, %v638
        %vm640 = vweird.f32 %v599
        %vm641 = vweird.f32 %v635
        %vm642 = vmor %vm640, %vm641
        %v643 = vsel %vm642, %v635, %v639
        %v644 = vand.u32 2147483647, %v599
        %vm645 = vcmp.eq.f32.partialorder %v644, 8.507059e+37
        %v646 = vand.u32 %v599, 2147483648
        %v647 = vor.u32 1.1754944e-38, %v646
        %v648 = vsel %vm645, %v647, %v643
        %v649 = vmul.f32 1.0, %v648
        %v650 = vrcp.pop %v600
        %v651 = vmul.f32 %v600, %v650
        %v652 = vsub.f32 1.0, %v651
        %v653 = vmul.f32 %v650, %v652
        %v654 = vadd.f32 %v650, %v653
        %vm655 = vweird.f32 %v600
        %vm656 = vweird.f32 %v650
        %vm657 = vmor %vm655, %vm656
        %v658 = vsel %vm657, %v650, %v654
        %v659 = vand.u32 2147483647, %v600
        %vm660 = vcmp.eq.f32.partialorder %v659, 8.507059e+37
        %v661 = vand.u32 %v600, 2147483648
        %v662 = vor.u32 1.1754944e-38, %v661
        %v663 = vsel %vm660, %v662, %v658
        %v664 = vmul.f32 1.0, %v663
        %v665 = vrcp.pop %v601
        %v666 = vmul.f32 %v601, %v665
        %v667 = vsub.f32 1.0, %v666
        %v668 = vmul.f32 %v665, %v667
        %v669 = vadd.f32 %v665, %v668
        %vm670 = vweird.f32 %v601
        %vm671 = vweird.f32 %v665
        %vm672 = vmor %vm670, %vm671
        %v673 = vsel %vm672, %v665, %v669
        %v674 = vand.u32 2147483647, %v601
        %vm675 = vcmp.eq.f32.partialorder %v674, 8.507059e+37
        %v676 = vand.u32 %v601, 2147483648
        %v677 = vor.u32 1.1754944e-38, %v676
        %v678 = vsel %vm675, %v677, %v673
        %v679 = vmul.f32 1.0, %v678
        %v680 = vrcp.pop %v602
        %v681 = vmul.f32 %v602, %v680
        %v682 = vsub.f32 1.0, %v681
        %v683 = vmul.f32 %v680, %v682
        %v684 = vadd.f32 %v680, %v683
        %vm685 = vweird.f32 %v602
        %vm686 = vweird.f32 %v680
        %vm687 = vmor %vm685, %vm686
        %v688 = vsel %vm687, %v680, %v684
        %v689 = vand.u32 2147483647, %v602
        %vm690 = vcmp.eq.f32.partialorder %v689, 8.507059e+37
        %v691 = vand.u32 %v602, 2147483648
        %v692 = vor.u32 1.1754944e-38, %v691
        %v693 = vsel %vm690, %v692, %v688
        %v694 = vmul.f32 1.0, %v693
        %v695 = vrcp.pop %v603
        %v696 = vmul.f32 %v603, %v695
        %v697 = vsub.f32 1.0, %v696
        %v698 = vmul.f32 %v695, %v697
        %v699 = vadd.f32 %v695, %v698
        %vm700 = vweird.f32 %v603
        %vm701 = vweird.f32 %v695
        %vm702 = vmor %vm700, %vm701
        %v703 = vsel %vm702, %v695, %v699
        %v704 = vand.u32 2147483647, %v603
        %vm705 = vcmp.eq.f32.partialorder %v704, 8.507059e+37
        %v706 = vand.u32 %v603, 2147483648
        %v707 = vor.u32 1.1754944e-38, %v706
        %v708 = vsel %vm705, %v707, %v703
        %v709 = vmul.f32 1.0, %v708
        %v710 = vrcp.pop %v604
        %v711 = vmul.f32 %v604, %v710
        %v712 = vsub.f32 1.0, %v711
        %v713 = vmul.f32 %v710, %v712
        %v714 = vadd.f32 %v710, %v713
        %vm715 = vweird.f32 %v604
        %vm716 = vweird.f32 %v710
        %vm717 = vmor %vm715, %vm716
        %v718 = vsel %vm717, %v710, %v714
        %v719 = vand.u32 2147483647, %v604
        %vm720 = vcmp.eq.f32.partialorder %v719, 8.507059e+37
        %v721 = vand.u32 %v604, 2147483648
        %v722 = vor.u32 1.1754944e-38, %v721
        %v723 = vsel %vm720, %v722, %v718
        %v724 = vmul.f32 1.0, %v723
        %v725 = vpack.c.bf16 %v619, %v619
        %v726 = vpack.c.bf16 %v634, %v634
        %v727 = vpack.c.bf16 %v649, %v649
        %v728 = vpack.c.bf16 %v664, %v664
        %v729 = vpack.c.bf16 %v679, %v679
        %v730 = vpack.c.bf16 %v694, %v694
        %v731 = vpack.c.bf16 %v709, %v709
        %v732 = vpack.c.bf16 %v724, %v724
        %733 = vst [vmem:[%s272] sm:$0xf] %v725
        %734 = vst [vmem:[%s272 + $0x4] sm:$0xf] %v726
        %735 = vst [vmem:[%s272 + $0x8] sm:$0xf] %v727
        %736 = vst [vmem:[%s272 + $0xc] sm:$0xf] %v728
        %737 = vst [vmem:[%s272 + $0x10] sm:$0xf] %v729
        %738 = vst [vmem:[%s272 + $0x14] sm:$0xf] %v730
        %739 = vst [vmem:[%s272 + $0x18] sm:$0xf] %v731
        %740 = vst [vmem:[%s272 + $0x1c] sm:$0xf] %v732
        %s741 = sand.u32 %s181, 1
        %s742 = scalar_lea.sflag [#allocation3], %s741
        %s743 = sand.u32 %s181, 1
        %s744 = smul.addr %s743, 32
        %s745 = scalar_lea.vmem [#allocation2], %s744
        // Predicated region
        $region49: #{tpu_custom_call.1} parent=47 // pred_check
          %p746 = pneg %p191
        $region50: #{tpu_custom_call.1} parent=47 // pred_check_branch
          %748 = sbr.rel (%p746) target = $region52
        $region51: #{tpu_custom_call.1} parent=47 // pred_region
          %s749 = smul.u32 8, %s21
          %751 = vsyncadd %s742, 0
          %s752 = smul.addr %s749, 4
          %s753 = scalar_lea.hbm %s7, %s752
          %s754 = sshll.u32 %s745, 4
          %s755 = int_to_ptr.vmem [resolvable:$true] %s754
          %s756 = sshll.u32 %s753, 4
          %s757 = int_to_ptr.hbm [resolvable:$true] %s756
          %762 = dma.vmem_to_hbm [thread:$0]  %s755, 512, %s757, %s742, 64, 64, 4
        $region52: #{tpu_custom_call.1} parent=47 // pred_fallthru
          _
      $region48: #{tpu_custom_call.1} parent=5 // pred_fallthru
        _
      %p763 = scmp.le.s32.totalorder 2, %s16
      // Predicated region
      $region53: #{tpu_custom_call.1} parent=5 // pred_check
        %p764 = pneg %p763
      $region54: #{tpu_custom_call.1} parent=5 // pred_check_branch
        %766 = sbr.rel (%p764) target = $region56
      $region55: #{tpu_custom_call.1} parent=5 // pred_region
        %s767 = ssub.s32 %s16, 2
        // Predicated region
        $region57: #{tpu_custom_call.1} parent=55 // pred_check
          %p768 = pneg %p197
        $region58: #{tpu_custom_call.1} parent=55 // pred_check_branch
          %770 = sbr.rel (%p768) target = $region60
        $region59: #{tpu_custom_call.1} parent=55 // pred_region
          %s771 = sand.u32 %s182, 1
          %s772 = scalar_lea.sflag [#allocation3], %s771
          %s773 = sand.u32 %s182, 1
          %s774 = smul.addr %s773, 32
          %s775 = scalar_lea.vmem [#allocation2], %s774
          %777 = dma.done %s772, 512
        $region60: #{tpu_custom_call.1} parent=55 // pred_fallthru
          _
      $region56: #{tpu_custom_call.1} parent=5 // pred_fallthru
        _
    $region6: #{tpu_custom_call.1} parent=1 // loop_footer
      %s20 = sadd.s32 1, %s16
    $region7: #{tpu_custom_call.1} parent=1 // loop_footer_branch
      %15 = sbr.rel target = $region3
    $region8: #{tpu_custom_call.1} parent=1 // loop_exit
      _
    %778 = vsyncpa [#allocation3], 1
    %s779 = scalar_lea.sflag [#allocation3], 1
    %780 = vsyncpa %s779, 1

</llo_original>
